<compile_context>
chip_gen: v5e
topology: v5e:2x2
jax: 0.10.0
libtpu: 0.0.40
codegen_flags: <defaults>
</compile_context>

<pallas_src>
import jax
import jax.numpy as jnp
from jax.experimental import pallas as pl
from jax.experimental.pallas import tpu as pltpu

# ----------------------------- sizes (small synthetic) -----------------------------
B = 2            # image batch
C_IN = 3         # image channels
IMG = 16         # spatial size
C_FEAT = 128     # stand-in for resnet50 feature dim (2048); 128 keeps MXU/lanes dense
EMBED = 128      # stand-in for embed_dim (200 in the assignment); 128 -> lane-dense store
NEG_SLOPE = 0.01 # nn.LeakyReLU default negative_slope


# ----------------------------- fused Pallas kernel -----------------------------
def encoder_kernel(s_ref, wc_ref, bc_ref, wfc_ref, bfc_ref, o_ref):
    # ResNet-50 stand-in: GAP(conv3x3_same(x)) == S @ Wc + bc, with S precomputed
    # in the wrapper as spatial window means (no im2col, no in-kernel reduction).
    feat = (jnp.dot(s_ref[...], wc_ref[...], preferred_element_type=jnp.float32)
            + bc_ref[...])                                    # [B, C_FEAT] f32
    # x = x.view(B, -1); x = LeakyReLU(x)     (elementwise kept in f32)
    x = jnp.where(feat > 0, feat, NEG_SLOPE * feat)
    # x = fc(x); x = LeakyReLU(x)
    y = (jnp.dot(x.astype(wfc_ref.dtype), wfc_ref[...],
                 preferred_element_type=jnp.float32)
         + bfc_ref[...])                                      # [B, EMBED] f32
    o_ref[...] = jnp.where(y > 0, y, NEG_SLOPE * y)           # single lane-dense store


def encoder_pallas(s, wc, bc, wfc, bfc):
    Bz, CK = s.shape
    CF = wc.shape[1]
    E = wfc.shape[1]
    return pl.pallas_call(
        encoder_kernel,
        out_shape=jax.ShapeDtypeStruct((Bz, E), jnp.float32),
        grid=(1,),
        in_specs=[pl.BlockSpec((Bz, CK), lambda i: (0, 0)),   # [B, C_IN*9]  bf16
                  pl.BlockSpec((CK, CF), lambda i: (0, 0)),   # conv weight  bf16
                  pl.BlockSpec((1, CF), lambda i: (0, 0)),    # conv bias    f32
                  pl.BlockSpec((CF, E), lambda i: (0, 0)),    # fc weight    bf16
                  pl.BlockSpec((1, E), lambda i: (0, 0))],    # fc bias      f32
        out_specs=pl.BlockSpec((Bz, E), lambda i: (0, 0)),
        compiler_params=pltpu.CompilerParams(
            dimension_semantics=("arbitrary",)),
    )(s, wc, bc, wfc, bfc)


# ----------------------------- wrapper glue -----------------------------
def gap_conv_inputs(img):
    # Collapse GAP ∘ (3x3 same conv, stride 1, pad 1):
    #   mean_{h,w} conv(x)[b, :, h, w] = S[b] @ Wc + bc
    #   S[b, c*9 + (dh*3+dw)] = mean_{h,w} x_pad[b, c, h+dh, w+dw]
    Bz, C, H, W = img.shape
    xp = jnp.pad(img, ((0, 0), (0, 0), (1, 1), (1, 1)))
    sums = [jnp.sum(xp[:, :, dh:dh + H, dw:dw + W], axis=(2, 3))
            for dh in range(3) for dw in range(3)]            # 9 x [B, C]
    s = jnp.stack(sums, axis=2).reshape(Bz, C * 9) / (H * W)  # [B, C*9]
    return s.astype(jnp.bfloat16)


def init_params(key):
    ks = jax.random.split(key, 4)
    sc = 0.05
    return dict(
        wc=(sc * jax.random.normal(ks[0], (C_IN * 9, C_FEAT), jnp.float32)
            ).astype(jnp.bfloat16),
        bc=sc * jax.random.normal(ks[1], (1, C_FEAT), jnp.float32),
        wfc=(sc * jax.random.normal(ks[2], (C_FEAT, EMBED), jnp.float32)
             ).astype(jnp.bfloat16),
        bfc=sc * jax.random.normal(ks[3], (1, EMBED), jnp.float32),
    )


@jax.jit
def encoder_forward(img, params):
    # x = resnet50(x); x = x.view(B, -1); x = relu(x); x = fc(x); x = relu(x)
    s = gap_conv_inputs(img)                                   # tiny [B, 27] vector
    return encoder_pallas(s, params['wc'], params['bc'],
                          params['wfc'], params['bfc'])        # [B, EMBED]


if __name__ == "__main__":
    key = jax.random.PRNGKey(0)
    k_img, k_par = jax.random.split(key, 2)

    img_batch = jax.random.normal(k_img, (B, C_IN, IMG, IMG), jnp.float32)
    params = init_params(k_par)

    out = encoder_forward(img_batch, params)
    out = jax.block_until_ready(out)
    assert out.shape == (B, EMBED), out.shape
    assert jnp.all(jnp.isfinite(out))
    print("KERNEL_OK")
</pallas_src>

<mosaic_0001>
module attributes {stable_mosaic.version = 11 : i64} {
  func.func @encoder_kernel(%arg0: i32, %arg1: memref<2x27xbf16, #tpu.memory_space<vmem>>, %arg2: memref<27x128xbf16, #tpu.memory_space<vmem>>, %arg3: memref<1x128xf32, #tpu.memory_space<vmem>>, %arg4: memref<128x128xbf16, #tpu.memory_space<vmem>>, %arg5: memref<1x128xf32, #tpu.memory_space<vmem>>, %arg6: memref<2x128xf32, #tpu.memory_space<vmem>>) attributes {dimension_semantics = [#tpu.dimension_semantics<arbitrary>], iteration_bounds = array<i64: 1>, scalar_prefetch = 0 : i64, scratch_operands = 0 : i64, tpu.core_type = #tpu.core_type<tc>, window_params = [{pipeline_mode = #tpu.pipeline_mode<synchronous>, transform_indices = @transform_0, window_bounds = array<i64: 2, 27>}, {pipeline_mode = #tpu.pipeline_mode<synchronous>, transform_indices = @transform_1, window_bounds = array<i64: 27, 128>}, {pipeline_mode = #tpu.pipeline_mode<synchronous>, transform_indices = @transform_2, window_bounds = array<i64: 1, 128>}, {pipeline_mode = #tpu.pipeline_mode<synchronous>, transform_indices = @transform_3, window_bounds = array<i64: 128, 128>}, {pipeline_mode = #tpu.pipeline_mode<synchronous>, transform_indices = @transform_4, window_bounds = array<i64: 1, 128>}, {pipeline_mode = #tpu.pipeline_mode<synchronous>, transform_indices = @transform_5, window_bounds = array<i64: 2, 128>}]} {
    %c0 = arith.constant 0 : index
    %c0_0 = arith.constant 0 : index
    %0 = vector.load %arg1[%c0, %c0_0] : memref<2x27xbf16, #tpu.memory_space<vmem>>, vector<2x27xbf16>
    %c0_1 = arith.constant 0 : index
    %c0_2 = arith.constant 0 : index
    %1 = vector.load %arg2[%c0_1, %c0_2] : memref<27x128xbf16, #tpu.memory_space<vmem>>, vector<27x128xbf16>
    %cst = arith.constant dense<0.000000e+00> : vector<2x128xf32>
    %2 = tpu.matmul %0, %1, %cst {dimension_numbers = #tpu.dot_dimension_numbers<[1], [0], [0], [1], [0, 0, 1, 1], [], []>} : vector<2x27xbf16>, vector<27x128xbf16>, vector<2x128xf32> -> vector<2x128xf32>
    %c0_3 = arith.constant 0 : index
    %c0_4 = arith.constant 0 : index
    %3 = vector.load %arg3[%c0_3, %c0_4] : memref<1x128xf32, #tpu.memory_space<vmem>>, vector<1x128xf32>
    %4 = vector.broadcast %3 : vector<1x128xf32> to vector<2x128xf32>
    %5 = arith.addf %2, %4 : vector<2x128xf32>
    %cst_5 = arith.constant 0.000000e+00 : f32
    %6 = vector.broadcast %cst_5 : f32 to vector<2x128xf32>
    %7 = arith.cmpf ogt, %5, %6 : vector<2x128xf32>
    %cst_6 = arith.constant 0.00999999977 : f32
    %8 = vector.broadcast %cst_6 : f32 to vector<2x128xf32>
    %9 = arith.mulf %8, %5 : vector<2x128xf32>
    %10 = arith.select %7, %5, %9 : vector<2x128xi1>, vector<2x128xf32>
    %11 = arith.truncf %10 : vector<2x128xf32> to vector<2x128xbf16>
    %c0_7 = arith.constant 0 : index
    %c0_8 = arith.constant 0 : index
    %12 = vector.load %arg4[%c0_7, %c0_8] : memref<128x128xbf16, #tpu.memory_space<vmem>>, vector<128x128xbf16>
    %cst_9 = arith.constant dense<0.000000e+00> : vector<2x128xf32>
    %13 = tpu.matmul %11, %12, %cst_9 {dimension_numbers = #tpu.dot_dimension_numbers<[1], [0], [0], [1], [0, 0, 1, 1], [], []>} : vector<2x128xbf16>, vector<128x128xbf16>, vector<2x128xf32> -> vector<2x128xf32>
    %c0_10 = arith.constant 0 : index
    %c0_11 = arith.constant 0 : index
    %14 = vector.load %arg5[%c0_10, %c0_11] : memref<1x128xf32, #tpu.memory_space<vmem>>, vector<1x128xf32>
    %15 = vector.broadcast %14 : vector<1x128xf32> to vector<2x128xf32>
    %16 = arith.addf %13, %15 : vector<2x128xf32>
    %cst_12 = arith.constant 0.000000e+00 : f32
    %17 = vector.broadcast %cst_12 : f32 to vector<2x128xf32>
    %18 = arith.cmpf ogt, %16, %17 : vector<2x128xf32>
    %cst_13 = arith.constant 0.00999999977 : f32
    %19 = vector.broadcast %cst_13 : f32 to vector<2x128xf32>
    %20 = arith.mulf %19, %16 : vector<2x128xf32>
    %21 = arith.select %18, %16, %20 : vector<2x128xi1>, vector<2x128xf32>
    %c0_14 = arith.constant 0 : index
    %c0_15 = arith.constant 0 : index
    %22 = vector.load %arg6[%c0_14, %c0_15] : memref<2x128xf32, #tpu.memory_space<vmem>>, vector<2x128xf32>
    tpu.vector_store %arg6[%c0_14, %c0_15], %21 {strides = array<i32>} : memref<2x128xf32, #tpu.memory_space<vmem>>, vector<2x128xf32>,
    return
  }
  func.func @transform_0(%arg0: i32) -> (i32, i32) {
    %c0_i32 = arith.constant 0 : i32
    %c0_i32_0 = arith.constant 0 : i32
    %c0_i32_1 = arith.constant 0 : i32
    return %c0_i32, %c0_i32_0 : i32, i32
  }
  func.func @transform_1(%arg0: i32) -> (i32, i32) {
    %c0_i32 = arith.constant 0 : i32
    %c0_i32_0 = arith.constant 0 : i32
    %c0_i32_1 = arith.constant 0 : i32
    return %c0_i32, %c0_i32_0 : i32, i32
  }
  func.func @transform_2(%arg0: i32) -> (i32, i32) {
    %c0_i32 = arith.constant 0 : i32
    %c0_i32_0 = arith.constant 0 : i32
    %c0_i32_1 = arith.constant 0 : i32
    return %c0_i32, %c0_i32_0 : i32, i32
  }
  func.func @transform_3(%arg0: i32) -> (i32, i32) {
    %c0_i32 = arith.constant 0 : i32
    %c0_i32_0 = arith.constant 0 : i32
    %c0_i32_1 = arith.constant 0 : i32
    return %c0_i32, %c0_i32_0 : i32, i32
  }
  func.func @transform_4(%arg0: i32) -> (i32, i32) {
    %c0_i32 = arith.constant 0 : i32
    %c0_i32_0 = arith.constant 0 : i32
    %c0_i32_1 = arith.constant 0 : i32
    return %c0_i32, %c0_i32_0 : i32, i32
  }
  func.func @transform_5(%arg0: i32) -> (i32, i32) {
    %c0_i32 = arith.constant 0 : i32
    %c0_i32_0 = arith.constant 0 : i32
    %c0_i32_1 = arith.constant 0 : i32
    return %c0_i32, %c0_i32_0 : i32, i32
  }
}

</mosaic_0001>

<llo_original>
// kernel: encoder_forward.1
$region0: #{encoder_forward.1}
  #allocation0 [shape = 'u32[]', space=smem, size = 0x4, offset = 0x4, fixed_abs, tag = 'smem constant byte address 0x4 - core index']
  #allocation1 [shape = 'u32[72,128]{1,0:T(1,128)}', space=vmem, size = 0x9000, scoped, tag = 'internal scratch']
  %s0 = inlined_call_operand.vmem [shape: bf16[2,27], index: 0, kind: input, shape index: {}]
  %s1 = inlined_call_operand.vmem [shape: bf16[27,128], index: 1, kind: input, shape index: {}]
  %s2 = inlined_call_operand.vmem [shape: f32[1,128], index: 2, kind: input, shape index: {}]
  %s3 = inlined_call_operand.vmem [shape: bf16[128,128], index: 3, kind: input, shape index: {}]
  %s4 = inlined_call_operand.vmem [shape: f32[1,128], index: 4, kind: input, shape index: {}]
  %s5 = inlined_call_operand.hbm [shape: f32[2,128], index: 5, kind: output, shape index: {}]
  %s6 = sld [smem:[#allocation0]]
  $region30: #{encoder_forward.1} parent=0
    _
  %s8 = ssub.s32 1, %s6
  %s9 = scalar_select 0, %s8, %s6
  $region1: #{encoder_forward.1} parent=0
    #allocation2 [shape = 'u8[1024]{0}', space=vmem, size = 0x400, scoped, tag = 'output window, operand 0, single buffered']
    #allocation3 [shape = 's32[1]{0}', space=sflag, size = 0x4, scoped, tag = 'scoped memory for encoder_forward.1']
    %10 = vsyncpa [#allocation3], 0
    // Predicated region
    $region2: #{encoder_forward.1} parent=1 // pred_check
      _
    $region3: #{encoder_forward.1} parent=1 // pred_check_branch
      %12 = sbr.rel (0) target = $region5
    $region4: #{encoder_forward.1} parent=1 // pred_region
      _
    $region5: #{encoder_forward.1} parent=1 // pred_fallthru
      _
    // Predicated region
    $region6: #{encoder_forward.1} parent=1 // pred_check
      _
    $region7: #{encoder_forward.1} parent=1 // pred_check_branch
      %14 = sbr.rel (0) target = $region9
    $region8: #{encoder_forward.1} parent=1 // pred_region
      _
    $region9: #{encoder_forward.1} parent=1 // pred_fallthru
      _
    // Predicated region
    $region10: #{encoder_forward.1} parent=1 // pred_check
      _
    $region11: #{encoder_forward.1} parent=1 // pred_check_branch
      %16 = sbr.rel (0) target = $region13
    $region12: #{encoder_forward.1} parent=1 // pred_region
      _
    $region13: #{encoder_forward.1} parent=1 // pred_fallthru
      _
    // Predicated region
    $region14: #{encoder_forward.1} parent=1 // pred_check
      _
    $region15: #{encoder_forward.1} parent=1 // pred_check_branch
      %18 = sbr.rel (0) target = $region17
    $region16: #{encoder_forward.1} parent=1 // pred_region
      _
    $region17: #{encoder_forward.1} parent=1 // pred_fallthru
      _
    // Predicated region
    $region18: #{encoder_forward.1} parent=1 // pred_check
      _
    $region19: #{encoder_forward.1} parent=1 // pred_check_branch
      %20 = sbr.rel (0) target = $region21
    $region20: #{encoder_forward.1} parent=1 // pred_region
      _
    $region21: #{encoder_forward.1} parent=1 // pred_fallthru
      _
    %v22 = vld [vmem:[%s0] sm:$0x1]
    %v23 = vld [vmem:[%s1] sm:$0xf]
    %v24 = vld [vmem:[%s1 + $0x4] sm:$0xf]
    %v25 = vld [vmem:[%s1 + $0x8] sm:$0xf]
    %v26 = vld [vmem:[%s1 + $0xc] sm:$0x3]
    %v27 = vld [vmem:[%s2] sm:$0x1]
    %v29 = vperm.slane %v27, 0
    %v35 = vunpack.c.l.b16 %v23
    %v36 = vunpack.c.l.b16 %v24
    %v37 = vunpack.c.l.b16 %v25
    %v38 = vunpack.c.l.b16 %v26
    %v39 = vpack.c.b16 %v36, %v35
    %v40 = vpack.c.b16 %v38, %v37
    %vm42 = vcmask 220160
    %v44 = vsel %vm42, %v22, 0
    %vm46 = vcmask 1044480
    %vm47 = vcmask 1045504
    %v48 = vsel %vm46, 4294967295, 65535
    %v49 = vsel %vm47, %v48, 0
    %v51 = vand.u32 %v40, %v49
    %53 = vmatpush.bf16.msra.mxu0 0
    %54 = vmatpush.bf16.msra.mxu0 0
    %55 = vmatpush.bf16.msra.mxu0 0
    %56 = vmatpush.bf16.msra.mxu0 0
    %57 = vmatpush.bf16.msra.mxu0 0
    %58 = vmatpush.bf16.msra.mxu0 0
    %59 = vmatpush.bf16.msra.mxu0 %v51
    %60 = vmatpush.bf16.msra.mxu0 %v39
    %61 = vmatmul.bf16.gmra.mxu0 %v44
    %v62 = vpop.f32.mrf.mxu0
    %v63 = vadd.f32 %v29, %v62
    %v64 = vpop.f32.mrf.mxu0
    %65 = vdwg.mxu0
    %vm66 = vcmp.gt.f32.partialorder %v63, 0.0
    %v67 = vmul.f32 %v63, 0.01
    %v68 = vsel %vm66, %v63, %v67
    %v69 = vpack.c.bf16 %v68, %v68
    %v70 = vld [vmem:[%s3] sm:$0xf]
    %v71 = vld [vmem:[%s3 + $0x4] sm:$0xf]
    %v72 = vld [vmem:[%s3 + $0x8] sm:$0xf]
    %v73 = vld [vmem:[%s3 + $0xc] sm:$0xf]
    %v74 = vld [vmem:[%s3 + $0x10] sm:$0xf]
    %v75 = vld [vmem:[%s3 + $0x14] sm:$0xf]
    %v76 = vld [vmem:[%s3 + $0x18] sm:$0xf]
    %v77 = vld [vmem:[%s3 + $0x1c] sm:$0xf]
    %v78 = vld [vmem:[%s3 + $0x20] sm:$0xf]
    %v79 = vld [vmem:[%s3 + $0x24] sm:$0xf]
    %v80 = vld [vmem:[%s3 + $0x28] sm:$0xf]
    %v81 = vld [vmem:[%s3 + $0x2c] sm:$0xf]
    %v82 = vld [vmem:[%s3 + $0x30] sm:$0xf]
    %v83 = vld [vmem:[%s3 + $0x34] sm:$0xf]
    %v84 = vld [vmem:[%s3 + $0x38] sm:$0xf]
    %v85 = vld [vmem:[%s3 + $0x3c] sm:$0xf]
    %v86 = vld [vmem:[%s4] sm:$0x1]
    %v88 = vperm.slane %v86, 0
    %v106 = vunpack.c.l.b16 %v70
    %v107 = vunpack.c.l.b16 %v71
    %v108 = vunpack.c.l.b16 %v72
    %v109 = vunpack.c.l.b16 %v73
    %v110 = vunpack.c.l.b16 %v74
    %v111 = vunpack.c.l.b16 %v75
    %v112 = vunpack.c.l.b16 %v76
    %v113 = vunpack.c.l.b16 %v77
    %v114 = vunpack.c.l.b16 %v78
    %v115 = vunpack.c.l.b16 %v79
    %v116 = vunpack.c.l.b16 %v80
    %v117 = vunpack.c.l.b16 %v81
    %v118 = vunpack.c.l.b16 %v82
    %v119 = vunpack.c.l.b16 %v83
    %v120 = vunpack.c.l.b16 %v84
    %v121 = vunpack.c.l.b16 %v85
    %v122 = vpack.c.b16 %v107, %v106
    %v123 = vpack.c.b16 %v109, %v108
    %v124 = vpack.c.b16 %v111, %v110
    %v125 = vpack.c.b16 %v113, %v112
    %v126 = vpack.c.b16 %v115, %v114
    %v127 = vpack.c.b16 %v117, %v116
    %v128 = vpack.c.b16 %v119, %v118
    %v129 = vpack.c.b16 %v121, %v120
    %138 = vmatpush.bf16.msra.mxu0 %v129
    %139 = vmatpush.bf16.msra.mxu0 %v128
    %140 = vmatpush.bf16.msra.mxu0 %v127
    %141 = vmatpush.bf16.msra.mxu0 %v126
    %142 = vmatpush.bf16.msra.mxu0 %v125
    %143 = vmatpush.bf16.msra.mxu0 %v124
    %144 = vmatpush.bf16.msra.mxu0 %v123
    %145 = vmatpush.bf16.msra.mxu0 %v122
    %146 = vmatmul.bf16.gmra.mxu0 %v69
    %v147 = vpop.f32.mrf.mxu0
    %v148 = vadd.f32 %v88, %v147
    %v149 = vpop.f32.mrf.mxu0
    %150 = vdwg.mxu0
    %vm151 = vcmp.gt.f32.partialorder %v148, 0.0
    %v152 = vmul.f32 %v148, 0.01
    %v153 = vsel %vm151, %v148, %v152
    %154 = vst [vmem:[#allocation2] sm:$0x3] %v153
    // Predicated region
    $region22: #{encoder_forward.1} parent=1 // pred_check
      _
    $region23: #{encoder_forward.1} parent=1 // pred_check_branch
      %156 = sbr.rel (0) target = $region25
    $region24: #{encoder_forward.1} parent=1 // pred_region
      %158 = vsyncadd [#allocation3], 0
      %s160 = sshll.u32 [#allocation2], 4
      %s161 = int_to_ptr.vmem [resolvable:$true] %s160
      %s162 = sshll.u32 %s5, 4
      %s163 = int_to_ptr.hbm [resolvable:$true] %s162
      %165 = dma.vmem_to_hbm [thread:$0]  %s161, 32, %s163, [#allocation3]
    $region25: #{encoder_forward.1} parent=1 // pred_fallthru
      _
    // Predicated region
    $region26: #{encoder_forward.1} parent=1 // pred_check
      _
    $region27: #{encoder_forward.1} parent=1 // pred_check_branch
      %167 = sbr.rel (0) target = $region29
    $region28: #{encoder_forward.1} parent=1 // pred_region
      %169 = dma.done [#allocation3], 32
    $region29: #{encoder_forward.1} parent=1 // pred_fallthru
      _
    %170 = vsyncpa [#allocation3], 1

</llo_original>
